<compile_context>
chip_gen: v7x
topology: tpu7x:2x2x1
jax: 0.10.0
libtpu: 0.0.40
codegen_flags: <defaults>
</compile_context>

<pallas_src>
from functools import partial

import jax
import jax.numpy as jnp
from jax.experimental import pallas as pl
from jax.experimental.pallas import tpu as pltpu


def _round_up(a, b):
    return ((a + b - 1) // b) * b


def _vmem_capacity_bytes():
    """Physical VMEM per core, with a conservative (v7x-sized) fallback."""
    try:
        return int(pltpu.get_tpu_info().vmem_capacity_bytes)
    except Exception:
        return 64 << 20


def _mlp_tanh_kernel(x_ref, w1_ref, b1_ref, w2_ref, b2_ref, o_ref):
    """Fused tanh( relu(x @ W1 + b1) @ W2 + b2 ) for one row tile.

    Matmuls run on the MXU in the weights' dtype (bf16 by default) with f32
    accumulation; elementwise math (bias, ReLU, tanh) stays in f32.
    """
    cdt = w1_ref.dtype
    x = x_ref[...].astype(cdt)
    h = jnp.dot(x, w1_ref[...], preferred_element_type=jnp.float32)
    h = jnp.maximum(h + b1_ref[...].astype(jnp.float32), 0.0)          # ReLU
    y = jnp.dot(h.astype(cdt), w2_ref[...], preferred_element_type=jnp.float32)
    y = y + b2_ref[...].astype(jnp.float32)
    o_ref[...] = jnp.tanh(y).astype(o_ref.dtype)                       # nn.Tanh


def param_predictor_forward(x, w1, b1, w2, b2, *, block_m=None,
                            single_buffer_weights=True,
                            core_parallel=False):
    """JAX wrapper reproducing ParamPredictorNetwork.forward.

    x : [..., input_dim]          (any number of leading dims)
    w1: [input_dim, input_dim]    (already transposed: (in, out))
    b1: [input_dim]
    w2: [input_dim, param_num]    (already transposed: (in, out))
    b2: [param_num]
    returns [..., param_num]
    """
    orig_shape = x.shape
    input_dim = orig_shape[-1]
    param_num = w2.shape[-1]

    x2 = x.reshape(-1, input_dim)                    # torch: x.view(-1, D)
    m = x2.shape[0]
    m8 = _round_up(max(m, 1), 8)

    # ---- lane padding: pad K (=input_dim, also hidden width) and N
    # (=param_num) to multiples of 128.  Zero rows/cols contribute nothing
    # (relu(0)=0, zero W2 rows), so this is exact.
    k_pad = _round_up(input_dim, 128)
    n_pad = _round_up(param_num, 128)

    itemsize = lambda dt: jnp.dtype(dt).itemsize
    out_dtype = x.dtype
    bytes_per_row = k_pad * itemsize(x2.dtype) + n_pad * itemsize(out_dtype)
    weight_bytes = ((k_pad * k_pad + k_pad * n_pad) * itemsize(w1.dtype)
                    + k_pad * itemsize(b1.dtype) + n_pad * itemsize(b2.dtype))
    weight_factor = 1 if single_buffer_weights else 2

    # ---- generation-aware VMEM clamp: ~100 MiB on 128 MiB chips (v5e/v6e),
    # ~56 MiB on 64 MiB chips (v7x); floor at 32 MiB.
    vmem_cap = _vmem_capacity_bytes()
    vmem_clamp = max(32 << 20, min(vmem_cap - (8 << 20), 100 << 20))

    if weight_factor * weight_bytes + 2 * 8 * bytes_per_row + (4 << 20) > vmem_clamp:
        # TODO(synk): implement K-tiled weight streaming (accumulator scratch)
        # for input_dim too large to keep W1/W2 resident in VMEM.
        raise NotImplementedError(
            f"resident weights ({weight_bytes} B) do not fit the VMEM budget "
            f"({vmem_clamp} B); K-tiled path not implemented")

    # Largest row tile the remaining VMEM supports (x/out tiles are
    # double-buffered by the pipeline).
    avail_for_tiles = vmem_clamp - weight_factor * weight_bytes - (6 << 20)
    max_block_m = max((avail_for_tiles // (2 * bytes_per_row)) // 8 * 8, 8)

    # ---- row tile selection (multiples of 8 for the f32 sublane).
    if block_m is None:
        if m8 <= 256:
            block_m = m8                               # single grid step
        elif m8 <= 4096:
            block_m = _round_up(-(-m8 // 4), 8)        # >=4 steps (>=2 per v7x TC)
        else:
            block_m = 1024                             # big tiles amortize step overhead
        block_m = max(min(block_m, max_block_m, m8), 8)
        # Prefer an exact divisor of m8 so the M pad can be skipped entirely
        # when K needs no padding.
        if m8 % block_m:
            for cand in range(block_m, max(block_m - 256, 8) - 1, -8):
                if m8 % cand == 0:
                    block_m = cand
                    break
    block_m = max(_round_up(block_m, 8), 8)

    m_pad = _round_up(max(m, 1), block_m)

    # ---- fused padding of x: one jnp.pad covering both the M and K axes
    # (single extra HBM pass over x instead of two).
    pad_m = m_pad - m
    pad_k = k_pad - input_dim
    if pad_m or pad_k:
        x2 = jnp.pad(x2, ((0, pad_m), (0, pad_k)))

    # Weight padding (small, one-shot; ideally store weights pre-padded).
    if pad_k:
        w1 = jnp.pad(w1, ((0, pad_k), (0, pad_k)))
        b1 = jnp.pad(b1, (0, pad_k))
        w2 = jnp.pad(w2, ((0, pad_k), (0, 0)))
    if n_pad != param_num:
        w2 = jnp.pad(w2, ((0, 0), (0, n_pad - param_num)))
        b2 = jnp.pad(b2, (0, n_pad - param_num))

    b1_2d = b1.reshape(1, k_pad)
    b2_2d = b2.reshape(1, n_pad)

    grid = (m_pad // block_m,)

    # ---- VMEM budget: double-buffered x/out row tiles + single-buffered
    # resident weights + headroom, clamped generation-aware.
    vmem_limit = 2 * block_m * bytes_per_row + weight_factor * weight_bytes + (8 << 20)
    vmem_limit = int(min(max(vmem_limit, 32 << 20), vmem_clamp))

    def _resident_spec(shape):
        # Constant index_map across the grid: single-buffer to save VMEM.
        if single_buffer_weights:
            return pl.BlockSpec(shape, lambda i: (0, 0),
                                pipeline_mode=pl.Buffered(buffer_count=1))
        return pl.BlockSpec(shape, lambda i: (0, 0))

    if core_parallel:
        # Explicitly shard row tiles across TensorCores (v7x: 2 TCs/chip).
        dim_sem = (pltpu.CORE_PARALLEL,)
    else:
        dim_sem = ("parallel",)

    out = pl.pallas_call(
        _mlp_tanh_kernel,
        out_shape=jax.ShapeDtypeStruct((m_pad, n_pad), out_dtype),
        grid_spec=pltpu.PrefetchScalarGridSpec(
            num_scalar_prefetch=0,
            grid=grid,
            in_specs=[
                pl.BlockSpec((block_m, k_pad), lambda i: (i, 0)),   # x row tile (streamed)
                _resident_spec((k_pad, k_pad)),                      # W1 (resident)
                _resident_spec((1, k_pad)),                          # b1
                _resident_spec((k_pad, n_pad)),                      # W2 (resident)
                _resident_spec((1, n_pad)),                          # b2
            ],
            out_specs=pl.BlockSpec((block_m, n_pad), lambda i: (i, 0)),
        ),
        compiler_params=pltpu.CompilerParams(
            dimension_semantics=dim_sem,
            vmem_limit_bytes=vmem_limit,
        ),
    )(x2, w1, b1_2d, w2, b2_2d)

    # NOTE: for large M with param_num << 128 this slice is an extra HBM pass;
    # latency-critical consumers can read the lane-padded buffer directly.
    out = out[:m, :param_num]
    return out.reshape(*orig_shape[:-1], param_num)


def init_params(key, input_dim, param_num, *, weight_dtype=jnp.bfloat16,
                bias_dtype=jnp.float32):
    """torch.nn.Linear-style init (U(-1/sqrt(fan_in), 1/sqrt(fan_in))).

    Weights are returned pre-transposed to (in, out); bf16 by default so the
    MXU runs in its native dtype (f32 accumulation keeps precision).  Use
    weight_dtype=jnp.float32 for closer parity with the f32 PyTorch module.
    """
    k1, k2, k3, k4 = jax.random.split(key, 4)
    bound = 1.0 / (input_dim ** 0.5)
    w1 = jax.random.uniform(k1, (input_dim, input_dim), jnp.float32, -bound, bound)
    b1 = jax.random.uniform(k2, (input_dim,), jnp.float32, -bound, bound)
    w2 = jax.random.uniform(k3, (input_dim, param_num), jnp.float32, -bound, bound)
    b2 = jax.random.uniform(k4, (param_num,), jnp.float32, -bound, bound)
    return (w1.astype(weight_dtype), b1.astype(bias_dtype),
            w2.astype(weight_dtype), b2.astype(bias_dtype))


def reference_forward(x, w1, b1, w2, b2):
    """Pure-JAX reference of the forward pass (same weight-dtype / f32-acc math)."""
    cdt = w1.dtype
    h = jnp.dot(x.astype(cdt), w1, preferred_element_type=jnp.float32)
    h = jnp.maximum(h + b1.astype(jnp.float32), 0.0)
    y = jnp.dot(h.astype(cdt), w2, preferred_element_type=jnp.float32)
    y = y + b2.astype(jnp.float32)
    return jnp.tanh(y).astype(x.dtype)


if __name__ == "__main__":
    # Small shapes consistent with the module: x is [batch, seq, input_dim]
    # (exercises the len(x.shape) > 2 flatten/unflatten path).
    batch, seq, input_dim, param_num = 2, 8, 32, 8

    key = jax.random.PRNGKey(0)
    kx, kp = jax.random.split(key)
    x = jax.random.normal(kx, (batch, seq, input_dim), jnp.float32)
    w1, b1, w2, b2 = init_params(kp, input_dim, param_num)

    fwd = jax.jit(param_predictor_forward)
    try:
        out = jax.block_until_ready(fwd(x, w1, b1, w2, b2))
    except Exception:
        # Safety net: if this jax build rejects single-buffered BlockSpecs
        # (pl.Buffered(1)), retry with the default double-buffered weights.
        fwd = jax.jit(partial(param_predictor_forward, single_buffer_weights=False))
        out = jax.block_until_ready(fwd(x, w1, b1, w2, b2))

    assert out.shape == (batch, seq, param_num), out.shape

    ref = reference_forward(x, w1, b1, w2, b2)
    max_err = float(jnp.max(jnp.abs(out - ref)))
    assert jnp.allclose(out, ref, atol=2e-3, rtol=2e-3), max_err

    print("KERNEL_OK")
</pallas_src>

<mosaic_0001>
module attributes {stable_mosaic.version = 11 : i64} {
  func.func @_mlp_tanh_kernel(%arg0: i32, %arg1: memref<16x128xf32, #tpu.memory_space<vmem>>, %arg2: memref<128x128xbf16, #tpu.memory_space<vmem>>, %arg3: memref<1x128xf32, #tpu.memory_space<vmem>>, %arg4: memref<128x128xbf16, #tpu.memory_space<vmem>>, %arg5: memref<1x128xf32, #tpu.memory_space<vmem>>, %arg6: memref<16x128xf32, #tpu.memory_space<vmem>>) attributes {dimension_semantics = [#tpu.dimension_semantics<parallel>], iteration_bounds = array<i64: 1>, scalar_prefetch = 0 : i64, scratch_operands = 0 : i64, tpu.core_type = #tpu.core_type<tc>, window_params = [{transform_indices = @transform_0, window_bounds = array<i64: 16, 128>}, {pipeline_mode = #tpu.pipeline_mode<synchronous>, transform_indices = @transform_1, window_bounds = array<i64: 128, 128>}, {pipeline_mode = #tpu.pipeline_mode<synchronous>, transform_indices = @transform_2, window_bounds = array<i64: 1, 128>}, {pipeline_mode = #tpu.pipeline_mode<synchronous>, transform_indices = @transform_3, window_bounds = array<i64: 128, 128>}, {pipeline_mode = #tpu.pipeline_mode<synchronous>, transform_indices = @transform_4, window_bounds = array<i64: 1, 128>}, {transform_indices = @transform_5, window_bounds = array<i64: 16, 128>}]} {
    %c0 = arith.constant 0 : index
    %c0_0 = arith.constant 0 : index
    %0 = vector.load %arg1[%c0, %c0_0] : memref<16x128xf32, #tpu.memory_space<vmem>>, vector<16x128xf32>
    %1 = arith.truncf %0 : vector<16x128xf32> to vector<16x128xbf16>
    %c0_1 = arith.constant 0 : index
    %c0_2 = arith.constant 0 : index
    %2 = vector.load %arg2[%c0_1, %c0_2] : memref<128x128xbf16, #tpu.memory_space<vmem>>, vector<128x128xbf16>
    %cst = arith.constant dense<0.000000e+00> : vector<16x128xf32>
    %3 = tpu.matmul %1, %2, %cst {dimension_numbers = #tpu.dot_dimension_numbers<[1], [0], [0], [1], [0, 0, 1, 1], [], []>} : vector<16x128xbf16>, vector<128x128xbf16>, vector<16x128xf32> -> vector<16x128xf32>
    %c0_3 = arith.constant 0 : index
    %c0_4 = arith.constant 0 : index
    %4 = vector.load %arg3[%c0_3, %c0_4] : memref<1x128xf32, #tpu.memory_space<vmem>>, vector<1x128xf32>
    %5 = vector.broadcast %4 : vector<1x128xf32> to vector<16x128xf32>
    %6 = arith.addf %3, %5 : vector<16x128xf32>
    %cst_5 = arith.constant 0.000000e+00 : f32
    %7 = vector.broadcast %cst_5 : f32 to vector<16x128xf32>
    %8 = arith.maximumf %6, %7 : vector<16x128xf32>
    %9 = arith.truncf %8 : vector<16x128xf32> to vector<16x128xbf16>
    %c0_6 = arith.constant 0 : index
    %c0_7 = arith.constant 0 : index
    %10 = vector.load %arg4[%c0_6, %c0_7] : memref<128x128xbf16, #tpu.memory_space<vmem>>, vector<128x128xbf16>
    %cst_8 = arith.constant dense<0.000000e+00> : vector<16x128xf32>
    %11 = tpu.matmul %9, %10, %cst_8 {dimension_numbers = #tpu.dot_dimension_numbers<[1], [0], [0], [1], [0, 0, 1, 1], [], []>} : vector<16x128xbf16>, vector<128x128xbf16>, vector<16x128xf32> -> vector<16x128xf32>
    %c0_9 = arith.constant 0 : index
    %c0_10 = arith.constant 0 : index
    %12 = vector.load %arg5[%c0_9, %c0_10] : memref<1x128xf32, #tpu.memory_space<vmem>>, vector<1x128xf32>
    %13 = vector.broadcast %12 : vector<1x128xf32> to vector<16x128xf32>
    %14 = arith.addf %11, %13 : vector<16x128xf32>
    %15 = math.tanh %14 : vector<16x128xf32>
    %c0_11 = arith.constant 0 : index
    %c0_12 = arith.constant 0 : index
    %16 = vector.load %arg6[%c0_11, %c0_12] : memref<16x128xf32, #tpu.memory_space<vmem>>, vector<16x128xf32>
    tpu.vector_store %arg6[%c0_11, %c0_12], %15 {strides = array<i32>} : memref<16x128xf32, #tpu.memory_space<vmem>>, vector<16x128xf32>,
    return
  }
  func.func @transform_0(%arg0: i32) -> (i32, i32) {
    %c0_i32 = arith.constant 0 : i32
    %c0_i32_0 = arith.constant 0 : i32
    return %arg0, %c0_i32 : i32, i32
  }
  func.func @transform_1(%arg0: i32) -> (i32, i32) {
    %c0_i32 = arith.constant 0 : i32
    %c0_i32_0 = arith.constant 0 : i32
    %c0_i32_1 = arith.constant 0 : i32
    return %c0_i32, %c0_i32_0 : i32, i32
  }
  func.func @transform_2(%arg0: i32) -> (i32, i32) {
    %c0_i32 = arith.constant 0 : i32
    %c0_i32_0 = arith.constant 0 : i32
    %c0_i32_1 = arith.constant 0 : i32
    return %c0_i32, %c0_i32_0 : i32, i32
  }
  func.func @transform_3(%arg0: i32) -> (i32, i32) {
    %c0_i32 = arith.constant 0 : i32
    %c0_i32_0 = arith.constant 0 : i32
    %c0_i32_1 = arith.constant 0 : i32
    return %c0_i32, %c0_i32_0 : i32, i32
  }
  func.func @transform_4(%arg0: i32) -> (i32, i32) {
    %c0_i32 = arith.constant 0 : i32
    %c0_i32_0 = arith.constant 0 : i32
    %c0_i32_1 = arith.constant 0 : i32
    return %c0_i32, %c0_i32_0 : i32, i32
  }
  func.func @transform_5(%arg0: i32) -> (i32, i32) {
    %c0_i32 = arith.constant 0 : i32
    %c0_i32_0 = arith.constant 0 : i32
    return %arg0, %c0_i32 : i32, i32
  }
}

module attributes {stable_mosaic.version = 11 : i64} {
  func.func @_mlp_tanh_kernel(%arg0: i32, %arg1: memref<16x128xf32, #tpu.memory_space<vmem>>, %arg2: memref<128x128xbf16, #tpu.memory_space<vmem>>, %arg3: memref<1x128xf32, #tpu.memory_space<vmem>>, %arg4: memref<128x128xbf16, #tpu.memory_space<vmem>>, %arg5: memref<1x128xf32, #tpu.memory_space<vmem>>, %arg6: memref<16x128xf32, #tpu.memory_space<vmem>>) attributes {dimension_semantics = [#tpu.dimension_semantics<parallel>], iteration_bounds = array<i64: 1>, scalar_prefetch = 0 : i64, scratch_operands = 0 : i64, tpu.core_type = #tpu.core_type<tc>, window_params = [{transform_indices = @transform_0, window_bounds = array<i64: 16, 128>}, {pipeline_mode = #tpu.pipeline_mode<synchronous>, transform_indices = @transform_1, window_bounds = array<i64: 128, 128>}, {pipeline_mode = #tpu.pipeline_mode<synchronous>, transform_indices = @transform_2, window_bounds = array<i64: 1, 128>}, {pipeline_mode = #tpu.pipeline_mode<synchronous>, transform_indices = @transform_3, window_bounds = array<i64: 128, 128>}, {pipeline_mode = #tpu.pipeline_mode<synchronous>, transform_indices = @transform_4, window_bounds = array<i64: 1, 128>}, {transform_indices = @transform_5, window_bounds = array<i64: 16, 128>}]} {
    %c0 = arith.constant 0 : index
    %c0_0 = arith.constant 0 : index
    %0 = vector.load %arg1[%c0, %c0_0] : memref<16x128xf32, #tpu.memory_space<vmem>>, vector<16x128xf32>
    %1 = arith.truncf %0 : vector<16x128xf32> to vector<16x128xbf16>
    %c0_1 = arith.constant 0 : index
    %c0_2 = arith.constant 0 : index
    %2 = vector.load %arg2[%c0_1, %c0_2] : memref<128x128xbf16, #tpu.memory_space<vmem>>, vector<128x128xbf16>
    %cst = arith.constant dense<0.000000e+00> : vector<16x128xf32>
    %3 = tpu.matmul %1, %2, %cst {dimension_numbers = #tpu.dot_dimension_numbers<[1], [0], [0], [1], [0, 0, 1, 1], [], []>} : vector<16x128xbf16>, vector<128x128xbf16>, vector<16x128xf32> -> vector<16x128xf32>
    %c0_3 = arith.constant 0 : index
    %c0_4 = arith.constant 0 : index
    %4 = vector.load %arg3[%c0_3, %c0_4] : memref<1x128xf32, #tpu.memory_space<vmem>>, vector<1x128xf32>
    %5 = vector.broadcast %4 : vector<1x128xf32> to vector<16x128xf32>
    %6 = arith.addf %3, %5 : vector<16x128xf32>
    %cst_5 = arith.constant 0.000000e+00 : f32
    %7 = vector.broadcast %cst_5 : f32 to vector<16x128xf32>
    %8 = arith.maximumf %6, %7 : vector<16x128xf32>
    %9 = arith.truncf %8 : vector<16x128xf32> to vector<16x128xbf16>
    %c0_6 = arith.constant 0 : index
    %c0_7 = arith.constant 0 : index
    %10 = vector.load %arg4[%c0_6, %c0_7] : memref<128x128xbf16, #tpu.memory_space<vmem>>, vector<128x128xbf16>
    %cst_8 = arith.constant dense<0.000000e+00> : vector<16x128xf32>
    %11 = tpu.matmul %9, %10, %cst_8 {dimension_numbers = #tpu.dot_dimension_numbers<[1], [0], [0], [1], [0, 0, 1, 1], [], []>} : vector<16x128xbf16>, vector<128x128xbf16>, vector<16x128xf32> -> vector<16x128xf32>
    %c0_9 = arith.constant 0 : index
    %c0_10 = arith.constant 0 : index
    %12 = vector.load %arg5[%c0_9, %c0_10] : memref<1x128xf32, #tpu.memory_space<vmem>>, vector<1x128xf32>
    %13 = vector.broadcast %12 : vector<1x128xf32> to vector<16x128xf32>
    %14 = arith.addf %11, %13 : vector<16x128xf32>
    %15 = math.tanh %14 : vector<16x128xf32>
    %c0_11 = arith.constant 0 : index
    %c0_12 = arith.constant 0 : index
    %16 = vector.load %arg6[%c0_11, %c0_12] : memref<16x128xf32, #tpu.memory_space<vmem>>, vector<16x128xf32>
    tpu.vector_store %arg6[%c0_11, %c0_12], %15 {strides = array<i32>} : memref<16x128xf32, #tpu.memory_space<vmem>>, vector<16x128xf32>,
    return
  }
  func.func @transform_0(%arg0: i32) -> (i32, i32) {
    %c0_i32 = arith.constant 0 : i32
    %c0_i32_0 = arith.constant 0 : i32
    return %arg0, %c0_i32 : i32, i32
  }
  func.func @transform_1(%arg0: i32) -> (i32, i32) {
    %c0_i32 = arith.constant 0 : i32
    %c0_i32_0 = arith.constant 0 : i32
    %c0_i32_1 = arith.constant 0 : i32
    return %c0_i32, %c0_i32_0 : i32, i32
  }
  func.func @transform_2(%arg0: i32) -> (i32, i32) {
    %c0_i32 = arith.constant 0 : i32
    %c0_i32_0 = arith.constant 0 : i32
    %c0_i32_1 = arith.constant 0 : i32
    return %c0_i32, %c0_i32_0 : i32, i32
  }
  func.func @transform_3(%arg0: i32) -> (i32, i32) {
    %c0_i32 = arith.constant 0 : i32
    %c0_i32_0 = arith.constant 0 : i32
    %c0_i32_1 = arith.constant 0 : i32
    return %c0_i32, %c0_i32_0 : i32, i32
  }
  func.func @transform_4(%arg0: i32) -> (i32, i32) {
    %c0_i32 = arith.constant 0 : i32
    %c0_i32_0 = arith.constant 0 : i32
    %c0_i32_1 = arith.constant 0 : i32
    return %c0_i32, %c0_i32_0 : i32, i32
  }
  func.func @transform_5(%arg0: i32) -> (i32, i32) {
    %c0_i32 = arith.constant 0 : i32
    %c0_i32_0 = arith.constant 0 : i32
    return %arg0, %c0_i32 : i32, i32
  }
}

</mosaic_0001>

<llo_original>
// kernel: param_predictor_forward.1
$region0: #{param_predictor_forward.1}
  #allocation0 [shape = 'u32[]', space=smem, size = 0x4, offset = 0x4, fixed_abs, tag = 'smem constant byte address 0x4 - core index']
  #allocation1 [shape = 'u32[144,128]{1,0:T(1,128)}', space=vmem, size = 0x12000, scoped, tag = 'internal scratch']
  %s0 = inlined_call_operand.vmem [shape: f32[16,128], index: 0, kind: input, shape index: {}]
  %s1 = inlined_call_operand.vmem [shape: bf16[128,128], index: 1, kind: input, shape index: {}]
  %s2 = inlined_call_operand.vmem [shape: f32[1,128], index: 2, kind: input, shape index: {}]
  %s3 = inlined_call_operand.vmem [shape: bf16[128,128], index: 3, kind: input, shape index: {}]
  %s4 = inlined_call_operand.vmem [shape: f32[1,128], index: 4, kind: input, shape index: {}]
  %s5 = inlined_call_operand.vmem [shape: f32[16,128], index: 5, kind: output, shape index: {}]
  %s6 = sld [smem:[#allocation0]]
  $region30: #{param_predictor_forward.1} parent=0
    _
  %s8 = ssub.s32 1, %s6
  %s9 = scalar_select 0, %s8, %s6
  // Predicated region
  $region2: #{param_predictor_forward.1} parent=0 // pred_check
    _
  $region3: #{param_predictor_forward.1} parent=0 // pred_check_branch
    %11 = sbr.rel (0) target = $region5
  $region4: #{param_predictor_forward.1} parent=0 // pred_region
    _
  $region5: #{param_predictor_forward.1} parent=0 // pred_fallthru
    _
  // Predicated region
  $region6: #{param_predictor_forward.1} parent=0 // pred_check
    _
  $region7: #{param_predictor_forward.1} parent=0 // pred_check_branch
    %13 = sbr.rel (0) target = $region9
  $region8: #{param_predictor_forward.1} parent=0 // pred_region
    _
  $region9: #{param_predictor_forward.1} parent=0 // pred_fallthru
    _
  // Predicated region
  $region10: #{param_predictor_forward.1} parent=0 // pred_check
    _
  $region11: #{param_predictor_forward.1} parent=0 // pred_check_branch
    %15 = sbr.rel (0) target = $region13
  $region12: #{param_predictor_forward.1} parent=0 // pred_region
    _
  $region13: #{param_predictor_forward.1} parent=0 // pred_fallthru
    _
  // Predicated region
  $region14: #{param_predictor_forward.1} parent=0 // pred_check
    _
  $region15: #{param_predictor_forward.1} parent=0 // pred_check_branch
    %17 = sbr.rel (0) target = $region17
  $region16: #{param_predictor_forward.1} parent=0 // pred_region
    _
  $region17: #{param_predictor_forward.1} parent=0 // pred_fallthru
    _
  // Predicated region
  $region18: #{param_predictor_forward.1} parent=0 // pred_check
    _
  $region19: #{param_predictor_forward.1} parent=0 // pred_check_branch
    %19 = sbr.rel (0) target = $region21
  $region20: #{param_predictor_forward.1} parent=0 // pred_region
    _
  $region21: #{param_predictor_forward.1} parent=0 // pred_fallthru
    _
  %v21 = vld [vmem:[%s0] sm:$0xff]
  %v22 = vld [vmem:[%s0 + $0x8] sm:$0xff]
  %v23 = vpack.c.bf16 %v22, %v21
  %v24 = vld [vmem:[%s1] sm:$0xf]
  %v25 = vld [vmem:[%s1 + $0x4] sm:$0xf]
  %v26 = vld [vmem:[%s1 + $0x8] sm:$0xf]
  %v27 = vld [vmem:[%s1 + $0xc] sm:$0xf]
  %v28 = vld [vmem:[%s1 + $0x10] sm:$0xf]
  %v29 = vld [vmem:[%s1 + $0x14] sm:$0xf]
  %v30 = vld [vmem:[%s1 + $0x18] sm:$0xf]
  %v31 = vld [vmem:[%s1 + $0x1c] sm:$0xf]
  %v32 = vld [vmem:[%s1 + $0x20] sm:$0xf]
  %v33 = vld [vmem:[%s1 + $0x24] sm:$0xf]
  %v34 = vld [vmem:[%s1 + $0x28] sm:$0xf]
  %v35 = vld [vmem:[%s1 + $0x2c] sm:$0xf]
  %v36 = vld [vmem:[%s1 + $0x30] sm:$0xf]
  %v37 = vld [vmem:[%s1 + $0x34] sm:$0xf]
  %v38 = vld [vmem:[%s1 + $0x38] sm:$0xf]
  %v39 = vld [vmem:[%s1 + $0x3c] sm:$0xf]
  %v40 = vld [vmem:[%s2] sm:$0x1]
  %v42 = vlaneseq
  %v43 = vshrl.u32 %v42, 7
  %v44 = vsub.s32 0, %v43
  %v45 = vrot.slane %v40, %v44
  %v63 = vunpack.c.l.b16 %v24
  %v64 = vunpack.c.l.b16 %v25
  %v65 = vunpack.c.l.b16 %v26
  %v66 = vunpack.c.l.b16 %v27
  %v67 = vunpack.c.l.b16 %v28
  %v68 = vunpack.c.l.b16 %v29
  %v69 = vunpack.c.l.b16 %v30
  %v70 = vunpack.c.l.b16 %v31
  %v71 = vunpack.c.l.b16 %v32
  %v72 = vunpack.c.l.b16 %v33
  %v73 = vunpack.c.l.b16 %v34
  %v74 = vunpack.c.l.b16 %v35
  %v75 = vunpack.c.l.b16 %v36
  %v76 = vunpack.c.l.b16 %v37
  %v77 = vunpack.c.l.b16 %v38
  %v78 = vunpack.c.l.b16 %v39
  %v79 = vpack.c.b16 %v64, %v63
  %v80 = vpack.c.b16 %v66, %v65
  %v81 = vpack.c.b16 %v68, %v67
  %v82 = vpack.c.b16 %v70, %v69
  %v83 = vpack.c.b16 %v72, %v71
  %v84 = vpack.c.b16 %v74, %v73
  %v85 = vpack.c.b16 %v76, %v75
  %v86 = vpack.c.b16 %v78, %v77
  %95 = vmatprep.subr.bf16.mxu0 0
  %96 = vmatpush1.bf16.msra.mxu0 %v79
  %97 = vmatprep.subr.bf16.mxu0 0
  %98 = vmatpush1.bf16.msra.mxu0 %v80
  %99 = vmatprep.subr.bf16.mxu0 0
  %100 = vmatpush1.bf16.msra.mxu0 %v81
  %101 = vmatprep.subr.bf16.mxu0 0
  %102 = vmatpush1.bf16.msra.mxu0 %v82
  %103 = vmatprep.subr.bf16.mxu0 0
  %104 = vmatpush1.bf16.msra.mxu0 %v83
  %105 = vmatprep.subr.bf16.mxu0 0
  %106 = vmatpush1.bf16.msra.mxu0 %v84
  %107 = vmatprep.subr.bf16.mxu0 0
  %108 = vmatpush1.bf16.msra.mxu0 %v85
  %109 = vmatprep.subr.bf16.mxu0 0
  %110 = vmatpush1.bf16.msra.mxu0 %v86
  %111 = vmatprep.subr.bf16.mxu0 0
  %112 = vmatpush1.bf16.msra.mxu0 0
  %113 = vmatprep.subr.bf16.mxu0 0
  %114 = vmatpush1.bf16.msra.mxu0 0
  %115 = vmatprep.subr.bf16.mxu0 0
  %116 = vmatpush1.bf16.msra.mxu0 0
  %117 = vmatprep.subr.bf16.mxu0 0
  %118 = vmatpush1.bf16.msra.mxu0 0
  %119 = vmatprep.subr.bf16.mxu0 0
  %120 = vmatpush1.bf16.msra.mxu0 0
  %121 = vmatprep.subr.bf16.mxu0 0
  %122 = vmatpush1.bf16.msra.mxu0 0
  %123 = vmatprep.subr.bf16.mxu0 0
  %124 = vmatpush1.bf16.msra.mxu0 0
  %125 = vmatprep.subr.bf16.mxu0 0
  %126 = vmatpush1.bf16.msra.mxu0 0
  %127 = vmatprep.mubr.bf16.mxu0 0
  %128 = vmatmul.mubr.bf16.gmra.mrb[0].mxu0 %v23
  %v129 = vpop.f32.mrb[0].mxu0
  %v130 = vadd.f32 %v45, %v129
  %v131 = vpop.f32.mrb[0].mxu0
  %v132 = vpop.f32.mrb[0].mxu0
  %v133 = vadd.f32 %v45, %v132
  %v134 = vpop.f32.mrb[0].mxu0
  %135 = vdwg.mxu0
  %v136 = vmax.f32 %v130, 0.0
  %v137 = vmax.f32 %v133, 0.0
  %v138 = vpack.c.bf16 %v137, %v136
  %v139 = vld [vmem:[%s3] sm:$0xf]
  %v140 = vld [vmem:[%s3 + $0x4] sm:$0xf]
  %v141 = vld [vmem:[%s3 + $0x8] sm:$0xf]
  %v142 = vld [vmem:[%s3 + $0xc] sm:$0xf]
  %v143 = vld [vmem:[%s3 + $0x10] sm:$0xf]
  %v144 = vld [vmem:[%s3 + $0x14] sm:$0xf]
  %v145 = vld [vmem:[%s3 + $0x18] sm:$0xf]
  %v146 = vld [vmem:[%s3 + $0x1c] sm:$0xf]
  %v147 = vld [vmem:[%s3 + $0x20] sm:$0xf]
  %v148 = vld [vmem:[%s3 + $0x24] sm:$0xf]
  %v149 = vld [vmem:[%s3 + $0x28] sm:$0xf]
  %v150 = vld [vmem:[%s3 + $0x2c] sm:$0xf]
  %v151 = vld [vmem:[%s3 + $0x30] sm:$0xf]
  %v152 = vld [vmem:[%s3 + $0x34] sm:$0xf]
  %v153 = vld [vmem:[%s3 + $0x38] sm:$0xf]
  %v154 = vld [vmem:[%s3 + $0x3c] sm:$0xf]
  %v155 = vld [vmem:[%s4] sm:$0x1]
  %v157 = vlaneseq
  %v158 = vshrl.u32 %v157, 7
  %v159 = vsub.s32 0, %v158
  %v160 = vrot.slane %v155, %v159
  %v178 = vunpack.c.l.b16 %v139
  %v179 = vunpack.c.l.b16 %v140
  %v180 = vunpack.c.l.b16 %v141
  %v181 = vunpack.c.l.b16 %v142
  %v182 = vunpack.c.l.b16 %v143
  %v183 = vunpack.c.l.b16 %v144
  %v184 = vunpack.c.l.b16 %v145
  %v185 = vunpack.c.l.b16 %v146
  %v186 = vunpack.c.l.b16 %v147
  %v187 = vunpack.c.l.b16 %v148
  %v188 = vunpack.c.l.b16 %v149
  %v189 = vunpack.c.l.b16 %v150
  %v190 = vunpack.c.l.b16 %v151
  %v191 = vunpack.c.l.b16 %v152
  %v192 = vunpack.c.l.b16 %v153
  %v193 = vunpack.c.l.b16 %v154
  %v194 = vpack.c.b16 %v179, %v178
  %v195 = vpack.c.b16 %v181, %v180
  %v196 = vpack.c.b16 %v183, %v182
  %v197 = vpack.c.b16 %v185, %v184
  %v198 = vpack.c.b16 %v187, %v186
  %v199 = vpack.c.b16 %v189, %v188
  %v200 = vpack.c.b16 %v191, %v190
  %v201 = vpack.c.b16 %v193, %v192
  %210 = vmatprep.subr.bf16.mxu0 0
  %211 = vmatpush1.bf16.msra.mxu0 %v194
  %212 = vmatprep.subr.bf16.mxu0 0
  %213 = vmatpush1.bf16.msra.mxu0 %v195
  %214 = vmatprep.subr.bf16.mxu0 0
  %215 = vmatpush1.bf16.msra.mxu0 %v196
  %216 = vmatprep.subr.bf16.mxu0 0
  %217 = vmatpush1.bf16.msra.mxu0 %v197
  %218 = vmatprep.subr.bf16.mxu0 0
  %219 = vmatpush1.bf16.msra.mxu0 %v198
  %220 = vmatprep.subr.bf16.mxu0 0
  %221 = vmatpush1.bf16.msra.mxu0 %v199
  %222 = vmatprep.subr.bf16.mxu0 0
  %223 = vmatpush1.bf16.msra.mxu0 %v200
  %224 = vmatprep.subr.bf16.mxu0 0
  %225 = vmatpush1.bf16.msra.mxu0 %v201
  %226 = vmatprep.subr.bf16.mxu0 0
  %227 = vmatpush1.bf16.msra.mxu0 0
  %228 = vmatprep.subr.bf16.mxu0 0
  %229 = vmatpush1.bf16.msra.mxu0 0
  %230 = vmatprep.subr.bf16.mxu0 0
  %231 = vmatpush1.bf16.msra.mxu0 0
  %232 = vmatprep.subr.bf16.mxu0 0
  %233 = vmatpush1.bf16.msra.mxu0 0
  %234 = vmatprep.subr.bf16.mxu0 0
  %235 = vmatpush1.bf16.msra.mxu0 0
  %236 = vmatprep.subr.bf16.mxu0 0
  %237 = vmatpush1.bf16.msra.mxu0 0
  %238 = vmatprep.subr.bf16.mxu0 0
  %239 = vmatpush1.bf16.msra.mxu0 0
  %240 = vmatprep.subr.bf16.mxu0 0
  %241 = vmatpush1.bf16.msra.mxu0 0
  %242 = vmatprep.mubr.bf16.mxu0 0
  %243 = vmatmul.mubr.bf16.gmra.mrb[0].mxu0 %v138
  %v244 = vpop.f32.mrb[0].mxu0
  %v245 = vadd.f32 %v160, %v244
  %v246 = vpop.f32.mrb[0].mxu0
  %v247 = vpop.f32.mrb[0].mxu0
  %v248 = vadd.f32 %v160, %v247
  %v249 = vpop.f32.mrb[0].mxu0
  %250 = vdwg.mxu0
  %v251 = vtanh.pop %v245
  %v252 = vtanh.pop %v248
  %253 = vst [vmem:[%s5] sm:$0xff] %v251
  %254 = vst [vmem:[%s5 + $0x8] sm:$0xff] %v252
  // Predicated region
  $region22: #{param_predictor_forward.1} parent=0 // pred_check
    _
  $region23: #{param_predictor_forward.1} parent=0 // pred_check_branch
    %256 = sbr.rel (0) target = $region25
  $region24: #{param_predictor_forward.1} parent=0 // pred_region
    _
  $region25: #{param_predictor_forward.1} parent=0 // pred_fallthru
    _
  // Predicated region
  $region26: #{param_predictor_forward.1} parent=0 // pred_check
    _
  $region27: #{param_predictor_forward.1} parent=0 // pred_check_branch
    %258 = sbr.rel (0) target = $region29
  $region28: #{param_predictor_forward.1} parent=0 // pred_region
    _
  $region29: #{param_predictor_forward.1} parent=0 // pred_fallthru
    _

// kernel: param_predictor_forward.1
$region0: #{param_predictor_forward.1}
  #allocation0 [shape = 'u32[]', space=smem, size = 0x4, offset = 0x4, fixed_abs, tag = 'smem constant byte address 0x4 - core index']
  #allocation1 [shape = 'u32[144,128]{1,0:T(1,128)}', space=vmem, size = 0x12000, scoped, tag = 'internal scratch']
  %s0 = inlined_call_operand.vmem [shape: f32[16,128], index: 0, kind: input, shape index: {}]
  %s1 = inlined_call_operand.vmem [shape: bf16[128,128], index: 1, kind: input, shape index: {}]
  %s2 = inlined_call_operand.vmem [shape: f32[1,128], index: 2, kind: input, shape index: {}]
  %s3 = inlined_call_operand.vmem [shape: bf16[128,128], index: 3, kind: input, shape index: {}]
  %s4 = inlined_call_operand.vmem [shape: f32[1,128], index: 4, kind: input, shape index: {}]
  %s5 = inlined_call_operand.vmem [shape: f32[16,128], index: 5, kind: output, shape index: {}]
  %s6 = sld [smem:[#allocation0]]
  $region30: #{param_predictor_forward.1} parent=0
    _
  %s8 = ssub.s32 1, %s6
  %s9 = scalar_select 0, %s8, %s6
  // Predicated region
  $region2: #{param_predictor_forward.1} parent=0 // pred_check
    _
  $region3: #{param_predictor_forward.1} parent=0 // pred_check_branch
    %11 = sbr.rel (0) target = $region5
  $region4: #{param_predictor_forward.1} parent=0 // pred_region
    _
  $region5: #{param_predictor_forward.1} parent=0 // pred_fallthru
    _
  // Predicated region
  $region6: #{param_predictor_forward.1} parent=0 // pred_check
    _
  $region7: #{param_predictor_forward.1} parent=0 // pred_check_branch
    %13 = sbr.rel (0) target = $region9
  $region8: #{param_predictor_forward.1} parent=0 // pred_region
    _
  $region9: #{param_predictor_forward.1} parent=0 // pred_fallthru
    _
  // Predicated region
  $region10: #{param_predictor_forward.1} parent=0 // pred_check
    _
  $region11: #{param_predictor_forward.1} parent=0 // pred_check_branch
    %15 = sbr.rel (0) target = $region13
  $region12: #{param_predictor_forward.1} parent=0 // pred_region
    _
  $region13: #{param_predictor_forward.1} parent=0 // pred_fallthru
    _
  // Predicated region
  $region14: #{param_predictor_forward.1} parent=0 // pred_check
    _
  $region15: #{param_predictor_forward.1} parent=0 // pred_check_branch
    %17 = sbr.rel (0) target = $region17
  $region16: #{param_predictor_forward.1} parent=0 // pred_region
    _
  $region17: #{param_predictor_forward.1} parent=0 // pred_fallthru
    _
  // Predicated region
  $region18: #{param_predictor_forward.1} parent=0 // pred_check
    _
  $region19: #{param_predictor_forward.1} parent=0 // pred_check_branch
    %19 = sbr.rel (0) target = $region21
  $region20: #{param_predictor_forward.1} parent=0 // pred_region
    _
  $region21: #{param_predictor_forward.1} parent=0 // pred_fallthru
    _
  %v21 = vld [vmem:[%s0] sm:$0xff]
  %v22 = vld [vmem:[%s0 + $0x8] sm:$0xff]
  %v23 = vpack.c.bf16 %v22, %v21
  %v24 = vld [vmem:[%s1] sm:$0xf]
  %v25 = vld [vmem:[%s1 + $0x4] sm:$0xf]
  %v26 = vld [vmem:[%s1 + $0x8] sm:$0xf]
  %v27 = vld [vmem:[%s1 + $0xc] sm:$0xf]
  %v28 = vld [vmem:[%s1 + $0x10] sm:$0xf]
  %v29 = vld [vmem:[%s1 + $0x14] sm:$0xf]
  %v30 = vld [vmem:[%s1 + $0x18] sm:$0xf]
  %v31 = vld [vmem:[%s1 + $0x1c] sm:$0xf]
  %v32 = vld [vmem:[%s1 + $0x20] sm:$0xf]
  %v33 = vld [vmem:[%s1 + $0x24] sm:$0xf]
  %v34 = vld [vmem:[%s1 + $0x28] sm:$0xf]
  %v35 = vld [vmem:[%s1 + $0x2c] sm:$0xf]
  %v36 = vld [vmem:[%s1 + $0x30] sm:$0xf]
  %v37 = vld [vmem:[%s1 + $0x34] sm:$0xf]
  %v38 = vld [vmem:[%s1 + $0x38] sm:$0xf]
  %v39 = vld [vmem:[%s1 + $0x3c] sm:$0xf]
  %v40 = vld [vmem:[%s2] sm:$0x1]
  %v42 = vlaneseq
  %v43 = vshrl.u32 %v42, 7
  %v44 = vsub.s32 0, %v43
  %v45 = vrot.slane %v40, %v44
  %v63 = vunpack.c.l.b16 %v24
  %v64 = vunpack.c.l.b16 %v25
  %v65 = vunpack.c.l.b16 %v26
  %v66 = vunpack.c.l.b16 %v27
  %v67 = vunpack.c.l.b16 %v28
  %v68 = vunpack.c.l.b16 %v29
  %v69 = vunpack.c.l.b16 %v30
  %v70 = vunpack.c.l.b16 %v31
  %v71 = vunpack.c.l.b16 %v32
  %v72 = vunpack.c.l.b16 %v33
  %v73 = vunpack.c.l.b16 %v34
  %v74 = vunpack.c.l.b16 %v35
  %v75 = vunpack.c.l.b16 %v36
  %v76 = vunpack.c.l.b16 %v37
  %v77 = vunpack.c.l.b16 %v38
  %v78 = vunpack.c.l.b16 %v39
  %v79 = vpack.c.b16 %v64, %v63
  %v80 = vpack.c.b16 %v66, %v65
  %v81 = vpack.c.b16 %v68, %v67
  %v82 = vpack.c.b16 %v70, %v69
  %v83 = vpack.c.b16 %v72, %v71
  %v84 = vpack.c.b16 %v74, %v73
  %v85 = vpack.c.b16 %v76, %v75
  %v86 = vpack.c.b16 %v78, %v77
  %95 = vmatprep.subr.bf16.mxu0 0
  %96 = vmatpush1.bf16.msra.mxu0 %v79
  %97 = vmatprep.subr.bf16.mxu0 0
  %98 = vmatpush1.bf16.msra.mxu0 %v80
  %99 = vmatprep.subr.bf16.mxu0 0
  %100 = vmatpush1.bf16.msra.mxu0 %v81
  %101 = vmatprep.subr.bf16.mxu0 0
  %102 = vmatpush1.bf16.msra.mxu0 %v82
  %103 = vmatprep.subr.bf16.mxu0 0
  %104 = vmatpush1.bf16.msra.mxu0 %v83
  %105 = vmatprep.subr.bf16.mxu0 0
  %106 = vmatpush1.bf16.msra.mxu0 %v84
  %107 = vmatprep.subr.bf16.mxu0 0
  %108 = vmatpush1.bf16.msra.mxu0 %v85
  %109 = vmatprep.subr.bf16.mxu0 0
  %110 = vmatpush1.bf16.msra.mxu0 %v86
  %111 = vmatprep.subr.bf16.mxu0 0
  %112 = vmatpush1.bf16.msra.mxu0 0
  %113 = vmatprep.subr.bf16.mxu0 0
  %114 = vmatpush1.bf16.msra.mxu0 0
  %115 = vmatprep.subr.bf16.mxu0 0
  %116 = vmatpush1.bf16.msra.mxu0 0
  %117 = vmatprep.subr.bf16.mxu0 0
  %118 = vmatpush1.bf16.msra.mxu0 0
  %119 = vmatprep.subr.bf16.mxu0 0
  %120 = vmatpush1.bf16.msra.mxu0 0
  %121 = vmatprep.subr.bf16.mxu0 0
  %122 = vmatpush1.bf16.msra.mxu0 0
  %123 = vmatprep.subr.bf16.mxu0 0
  %124 = vmatpush1.bf16.msra.mxu0 0
  %125 = vmatprep.subr.bf16.mxu0 0
  %126 = vmatpush1.bf16.msra.mxu0 0
  %127 = vmatprep.mubr.bf16.mxu0 0
  %128 = vmatmul.mubr.bf16.gmra.mrb[0].mxu0 %v23
  %v129 = vpop.f32.mrb[0].mxu0
  %v130 = vadd.f32 %v45, %v129
  %v131 = vpop.f32.mrb[0].mxu0
  %v132 = vpop.f32.mrb[0].mxu0
  %v133 = vadd.f32 %v45, %v132
  %v134 = vpop.f32.mrb[0].mxu0
  %135 = vdwg.mxu0
  %v136 = vmax.f32 %v130, 0.0
  %v137 = vmax.f32 %v133, 0.0
  %v138 = vpack.c.bf16 %v137, %v136
  %v139 = vld [vmem:[%s3] sm:$0xf]
  %v140 = vld [vmem:[%s3 + $0x4] sm:$0xf]
  %v141 = vld [vmem:[%s3 + $0x8] sm:$0xf]
  %v142 = vld [vmem:[%s3 + $0xc] sm:$0xf]
  %v143 = vld [vmem:[%s3 + $0x10] sm:$0xf]
  %v144 = vld [vmem:[%s3 + $0x14] sm:$0xf]
  %v145 = vld [vmem:[%s3 + $0x18] sm:$0xf]
  %v146 = vld [vmem:[%s3 + $0x1c] sm:$0xf]
  %v147 = vld [vmem:[%s3 + $0x20] sm:$0xf]
  %v148 = vld [vmem:[%s3 + $0x24] sm:$0xf]
  %v149 = vld [vmem:[%s3 + $0x28] sm:$0xf]
  %v150 = vld [vmem:[%s3 + $0x2c] sm:$0xf]
  %v151 = vld [vmem:[%s3 + $0x30] sm:$0xf]
  %v152 = vld [vmem:[%s3 + $0x34] sm:$0xf]
  %v153 = vld [vmem:[%s3 + $0x38] sm:$0xf]
  %v154 = vld [vmem:[%s3 + $0x3c] sm:$0xf]
  %v155 = vld [vmem:[%s4] sm:$0x1]
  %v157 = vlaneseq
  %v158 = vshrl.u32 %v157, 7
  %v159 = vsub.s32 0, %v158
  %v160 = vrot.slane %v155, %v159
  %v178 = vunpack.c.l.b16 %v139
  %v179 = vunpack.c.l.b16 %v140
  %v180 = vunpack.c.l.b16 %v141
  %v181 = vunpack.c.l.b16 %v142
  %v182 = vunpack.c.l.b16 %v143
  %v183 = vunpack.c.l.b16 %v144
  %v184 = vunpack.c.l.b16 %v145
  %v185 = vunpack.c.l.b16 %v146
  %v186 = vunpack.c.l.b16 %v147
  %v187 = vunpack.c.l.b16 %v148
  %v188 = vunpack.c.l.b16 %v149
  %v189 = vunpack.c.l.b16 %v150
  %v190 = vunpack.c.l.b16 %v151
  %v191 = vunpack.c.l.b16 %v152
  %v192 = vunpack.c.l.b16 %v153
  %v193 = vunpack.c.l.b16 %v154
  %v194 = vpack.c.b16 %v179, %v178
  %v195 = vpack.c.b16 %v181, %v180
  %v196 = vpack.c.b16 %v183, %v182
  %v197 = vpack.c.b16 %v185, %v184
  %v198 = vpack.c.b16 %v187, %v186
  %v199 = vpack.c.b16 %v189, %v188
  %v200 = vpack.c.b16 %v191, %v190
  %v201 = vpack.c.b16 %v193, %v192
  %210 = vmatprep.subr.bf16.mxu0 0
  %211 = vmatpush1.bf16.msra.mxu0 %v194
  %212 = vmatprep.subr.bf16.mxu0 0
  %213 = vmatpush1.bf16.msra.mxu0 %v195
  %214 = vmatprep.subr.bf16.mxu0 0
  %215 = vmatpush1.bf16.msra.mxu0 %v196
  %216 = vmatprep.subr.bf16.mxu0 0
  %217 = vmatpush1.bf16.msra.mxu0 %v197
  %218 = vmatprep.subr.bf16.mxu0 0
  %219 = vmatpush1.bf16.msra.mxu0 %v198
  %220 = vmatprep.subr.bf16.mxu0 0
  %221 = vmatpush1.bf16.msra.mxu0 %v199
  %222 = vmatprep.subr.bf16.mxu0 0
  %223 = vmatpush1.bf16.msra.mxu0 %v200
  %224 = vmatprep.subr.bf16.mxu0 0
  %225 = vmatpush1.bf16.msra.mxu0 %v201
  %226 = vmatprep.subr.bf16.mxu0 0
  %227 = vmatpush1.bf16.msra.mxu0 0
  %228 = vmatprep.subr.bf16.mxu0 0
  %229 = vmatpush1.bf16.msra.mxu0 0
  %230 = vmatprep.subr.bf16.mxu0 0
  %231 = vmatpush1.bf16.msra.mxu0 0
  %232 = vmatprep.subr.bf16.mxu0 0
  %233 = vmatpush1.bf16.msra.mxu0 0
  %234 = vmatprep.subr.bf16.mxu0 0
  %235 = vmatpush1.bf16.msra.mxu0 0
  %236 = vmatprep.subr.bf16.mxu0 0
  %237 = vmatpush1.bf16.msra.mxu0 0
  %238 = vmatprep.subr.bf16.mxu0 0
  %239 = vmatpush1.bf16.msra.mxu0 0
  %240 = vmatprep.subr.bf16.mxu0 0
  %241 = vmatpush1.bf16.msra.mxu0 0
  %242 = vmatprep.mubr.bf16.mxu0 0
  %243 = vmatmul.mubr.bf16.gmra.mrb[0].mxu0 %v138
  %v244 = vpop.f32.mrb[0].mxu0
  %v245 = vadd.f32 %v160, %v244
  %v246 = vpop.f32.mrb[0].mxu0
  %v247 = vpop.f32.mrb[0].mxu0
  %v248 = vadd.f32 %v160, %v247
  %v249 = vpop.f32.mrb[0].mxu0
  %250 = vdwg.mxu0
  %v251 = vtanh.pop %v245
  %v252 = vtanh.pop %v248
  %253 = vst [vmem:[%s5] sm:$0xff] %v251
  %254 = vst [vmem:[%s5 + $0x8] sm:$0xff] %v252
  // Predicated region
  $region22: #{param_predictor_forward.1} parent=0 // pred_check
    _
  $region23: #{param_predictor_forward.1} parent=0 // pred_check_branch
    %256 = sbr.rel (0) target = $region25
  $region24: #{param_predictor_forward.1} parent=0 // pred_region
    _
  $region25: #{param_predictor_forward.1} parent=0 // pred_fallthru
    _
  // Predicated region
  $region26: #{param_predictor_forward.1} parent=0 // pred_check
    _
  $region27: #{param_predictor_forward.1} parent=0 // pred_check_branch
    %258 = sbr.rel (0) target = $region29
  $region28: #{param_predictor_forward.1} parent=0 // pred_region
    _
  $region29: #{param_predictor_forward.1} parent=0 // pred_fallthru
    _

</llo_original>
